<compile_context>
chip_gen: v7x
topology: tpu7x:2x2x1
jax: 0.10.0
libtpu: 0.0.40
codegen_flags: <defaults>
</compile_context>

<pallas_src>
import math

import jax
import jax.numpy as jnp
from jax.experimental import pallas as pl
from jax.experimental.pallas import tpu as pltpu


def _round_up(x, n):
    return ((x + n - 1) // n) * n


# ---------------------------------------------------------------------------
# Pallas kernel: y = relu(x @ W1 + b1) @ W2 + b2
#   x arrives in its original dtype (f32) and is cast to the MXU compute dtype
#   in-kernel; accumulation, bias-add and relu are f32 (v5e has no bf16 VPU);
#   the output is cast to the requested output dtype.
# ---------------------------------------------------------------------------
def _mlp_kernel(x_ref, w1_ref, b1_ref, w2_ref, b2_ref, o_ref):
    x = x_ref[...].astype(w1_ref.dtype)          # cheap VPU cast, hidden under MXU
    h = jnp.dot(x, w1_ref[...], preferred_element_type=jnp.float32)
    h = jnp.maximum(h + b1_ref[...], 0.0)        # F.relu in f32
    y = jnp.dot(h.astype(w2_ref.dtype), w2_ref[...],
                preferred_element_type=jnp.float32)
    o_ref[...] = (y + b2_ref[...]).astype(o_ref.dtype)


def _vmem_cap_bytes():
    """Generation-aware scoped-VMEM cap (v7x has only 64 MiB physical VMEM)."""
    try:
        phys = int(pltpu.get_tpu_info().vmem_capacity_bytes)
    except Exception:
        phys = 64 * 1024 * 1024                  # conservative fallback (v7x)
    # leave headroom for Mosaic internal scratch / neighbouring allocations
    return min((3 * phys) // 4, 100 * 1024 * 1024)


def _footprint_bytes(tile_m, input_dim, hidden_p, output_p,
                     in_itemsize, cmp_itemsize, out_itemsize, nbuf_x):
    weights = (input_dim * hidden_p + hidden_p * output_p) * cmp_itemsize
    biases = (hidden_p + output_p) * 4
    x_bufs = nbuf_x * tile_m * input_dim * in_itemsize       # pipelined input
    o_bufs = 2 * tile_m * output_p * out_itemsize            # pipelined output
    # live in-kernel intermediates: bf16 copy of x, f32 h, bf16 copy of h,
    # f32 accumulator of the second matmul
    interm = (tile_m * input_dim * cmp_itemsize
              + tile_m * hidden_p * 4
              + tile_m * hidden_p * cmp_itemsize
              + tile_m * output_p * 4)
    return weights + biases + x_bufs + o_bufs + interm


def project_pallas(z, w1_t, b1, w2_t, b2, *, tile_m=512,
                   compute_dtype=jnp.bfloat16, out_dtype=None,
                   lane_align=128):
    """Apply fc2(relu(fc1(.))) to z of shape [num_aug, B, input_dim].

    `lane_align=128` keeps hidden/output lane-dense on every generation;
    pass 256 to fully align with the v6e/v7x 256x256 MXU for odd head sizes.
    `out_dtype` may be set to bf16 to halve writeback bytes (mem-bound v5e).
    """
    num_aug, batch, input_dim = z.shape
    hidden_dim = w1_t.shape[1]
    output_dim = w2_t.shape[1]
    out_dtype = z.dtype if out_dtype is None else out_dtype

    # ---- lane-dense hidden/output (zero-pad weight columns, slice at end) ---
    hidden_p = _round_up(hidden_dim, lane_align)
    output_p = _round_up(output_dim, lane_align)
    w1c = w1_t.astype(compute_dtype)
    w2c = w2_t.astype(compute_dtype)
    b1f = b1.astype(jnp.float32)
    b2f = b2.astype(jnp.float32)
    if hidden_p != hidden_dim:
        w1c = jnp.pad(w1c, ((0, 0), (0, hidden_p - hidden_dim)))
        w2c = jnp.pad(w2c, ((0, hidden_p - hidden_dim), (0, 0)))
        b1f = jnp.pad(b1f, (0, hidden_p - hidden_dim))
    if output_p != output_dim:
        w2c = jnp.pad(w2c, ((0, 0), (0, output_p - output_dim)))
        b2f = jnp.pad(b2f, (0, output_p - output_dim))
    b1_2d = b1f.reshape(1, hidden_p)
    b2_2d = b2f.reshape(1, output_p)

    m = num_aug * batch
    in_itemsize = jnp.dtype(z.dtype).itemsize
    cmp_itemsize = jnp.dtype(compute_dtype).itemsize
    out_itemsize = jnp.dtype(out_dtype).itemsize

    # ---- row-tile selection -------------------------------------------------
    # 16-row alignment (bf16 sublane packing); collapse to one step for tiny m;
    # guarantee >= 2 grid steps once m > 256 so both v7x TCs get work; then
    # shrink until the corrected footprint fits the generation-aware budget.
    tile_m_eff = min(tile_m, _round_up(m, 16))
    if m > 256:
        tile_m_eff = min(tile_m_eff, _round_up(pl.cdiv(m, 2), 128))
    tile_m_eff = max(tile_m_eff, 16)

    cap = _vmem_cap_bytes()

    def fits(t, nbuf_x=2):
        fp = _footprint_bytes(t, input_dim, hidden_p, output_p,
                              in_itemsize, cmp_itemsize, out_itemsize, nbuf_x)
        return (fp + fp // 5 + (2 << 20)) <= cap, fp

    while tile_m_eff > 128 and not fits(tile_m_eff)[0]:
        tile_m_eff -= 128

    m_pad = _round_up(m, tile_m_eff)
    grid_m = m_pad // tile_m_eff

    # Deeper pipeline on x only when the grid is long and VMEM allows.
    use_triple = grid_m >= 4 and fits(tile_m_eff, nbuf_x=3)[0]
    nbuf_x = 3 if use_triple else 2
    _, fp = fits(tile_m_eff, nbuf_x=nbuf_x)
    vmem_limit = int(min(max(fp + fp // 5 + (2 << 20), 16 << 20), cap))

    # ---- inputs: no wrapper-side cast; pad rows only when a remainder exists
    xr = z.reshape(m, input_dim)
    if m_pad != m:
        xr = jnp.pad(xr, ((0, m_pad - m), (0, 0)))

    # Advisory cost estimate for XLA's scheduler.
    flops = 2 * m_pad * (input_dim * hidden_p + hidden_p * output_p)
    bytes_accessed = (m_pad * input_dim * in_itemsize
                      + (input_dim * hidden_p + hidden_p * output_p) * cmp_itemsize
                      + (hidden_p + output_p) * 4
                      + m_pad * output_p * out_itemsize)

    const = pl.Buffered(1)  # weights/biases never change across grid steps
    x_kwargs = {"pipeline_mode": pl.Buffered(3)} if use_triple else {}

    out2d = pl.pallas_call(
        _mlp_kernel,
        out_shape=jax.ShapeDtypeStruct((m_pad, output_p), out_dtype),
        grid_spec=pltpu.PrefetchScalarGridSpec(
            num_scalar_prefetch=0,
            grid=(grid_m,),
            in_specs=[
                pl.BlockSpec((tile_m_eff, input_dim), lambda i: (i, 0),
                             **x_kwargs),
                pl.BlockSpec((input_dim, hidden_p), lambda i: (0, 0),
                             pipeline_mode=const),
                pl.BlockSpec((1, hidden_p), lambda i: (0, 0),
                             pipeline_mode=const),
                pl.BlockSpec((hidden_p, output_p), lambda i: (0, 0),
                             pipeline_mode=const),
                pl.BlockSpec((1, output_p), lambda i: (0, 0),
                             pipeline_mode=const),
            ],
            out_specs=pl.BlockSpec((tile_m_eff, output_p), lambda i: (i, 0)),
        ),
        compiler_params=pltpu.CompilerParams(
            dimension_semantics=("parallel",),
            vmem_limit_bytes=vmem_limit,
        ),
        cost_estimate=pl.CostEstimate(
            flops=flops, transcendentals=0, bytes_accessed=bytes_accessed),
    )(xr, w1c, b1_2d, w2c, b2_2d)

    return out2d[:m, :output_dim].reshape(num_aug, batch, output_dim)


# ---------------------------------------------------------------------------
# Deterministic parameter init matching the PyTorch module's __init__
# ---------------------------------------------------------------------------
def init_params(key, input_dim, hidden_dim, output_dim, dtype=jnp.float32):
    k1, k2, k3, k4 = jax.random.split(key, 4)

    # xavier_normal_(gain=1.4): std = gain * sqrt(2 / (fan_in + fan_out))
    std1 = 1.4 * math.sqrt(2.0 / (input_dim + hidden_dim))
    std2 = 1.4 * math.sqrt(2.0 / (hidden_dim + output_dim))
    # store transposed ([in, out]) for row-major matmul in the kernel
    w1_t = (jax.random.normal(k1, (input_dim, hidden_dim)) * std1).astype(dtype)
    w2_t = (jax.random.normal(k2, (hidden_dim, output_dim)) * std2).astype(dtype)

    # nn.Linear default bias init: U(-1/sqrt(fan_in), 1/sqrt(fan_in))
    bnd1 = 1.0 / math.sqrt(input_dim)
    bnd2 = 1.0 / math.sqrt(hidden_dim)
    b1 = jax.random.uniform(k3, (hidden_dim,), minval=-bnd1, maxval=bnd1).astype(dtype)
    b2 = jax.random.uniform(k4, (output_dim,), minval=-bnd2, maxval=bnd2).astype(dtype)
    return w1_t, b1, w2_t, b2


if __name__ == "__main__":
    # small shapes consistent with the module (scaled down from 768/768/1536)
    num_aug = 2        # number of augmentation views (len(self.augmentor))
    batch = 8
    input_dim = 256
    hidden_dim = 256
    output_dim = 512

    key = jax.random.PRNGKey(0)
    kz, kp = jax.random.split(key)

    # Synthetic stand-in for `torch.stack(zs)` from Encoder.forward:
    # one CLS embedding per augmentation view.
    z = jax.random.normal(kz, (num_aug, batch, input_dim), dtype=jnp.float32)

    w1_t, b1, w2_t, b2 = init_params(kp, input_dim, hidden_dim, output_dim)

    # Pallas projection head (Encoder.project hot path)
    out = project_pallas(z, w1_t, b1, w2_t, b2)
    out = jax.block_until_ready(out)

    # reference check in plain JAX (f32); bf16 MXU operands -> wider tolerance.
    # NOTE: keep compute_dtype=jnp.float32 if this head feeds a precision-
    # sensitive loss.
    ref = jnp.maximum(z @ w1_t + b1, 0.0) @ w2_t + b2
    assert out.shape == (num_aug, batch, output_dim)
    assert jnp.allclose(out, ref, atol=5e-2, rtol=5e-2), (
        float(jnp.max(jnp.abs(out - ref))))

    print("KERNEL_OK")
</pallas_src>

<mosaic_0001>
module attributes {stable_mosaic.version = 11 : i64} {
  func.func @_mlp_kernel(%arg0: i32, %arg1: memref<16x256xf32, #tpu.memory_space<vmem>>, %arg2: memref<256x256xbf16, #tpu.memory_space<vmem>>, %arg3: memref<1x256xf32, #tpu.memory_space<vmem>>, %arg4: memref<256x512xbf16, #tpu.memory_space<vmem>>, %arg5: memref<1x512xf32, #tpu.memory_space<vmem>>, %arg6: memref<16x512xf32, #tpu.memory_space<vmem>>) attributes {dimension_semantics = [#tpu.dimension_semantics<parallel>], iteration_bounds = array<i64: 1>, scalar_prefetch = 0 : i64, scratch_operands = 0 : i64, tpu.core_type = #tpu.core_type<tc>, window_params = [{transform_indices = @transform_0, window_bounds = array<i64: 16, 256>}, {pipeline_mode = #tpu.pipeline_mode<synchronous>, transform_indices = @transform_1, window_bounds = array<i64: 256, 256>}, {pipeline_mode = #tpu.pipeline_mode<synchronous>, transform_indices = @transform_2, window_bounds = array<i64: 1, 256>}, {pipeline_mode = #tpu.pipeline_mode<synchronous>, transform_indices = @transform_3, window_bounds = array<i64: 256, 512>}, {pipeline_mode = #tpu.pipeline_mode<synchronous>, transform_indices = @transform_4, window_bounds = array<i64: 1, 512>}, {transform_indices = @transform_5, window_bounds = array<i64: 16, 512>}]} {
    %c0 = arith.constant 0 : index
    %c0_0 = arith.constant 0 : index
    %0 = vector.load %arg1[%c0, %c0_0] : memref<16x256xf32, #tpu.memory_space<vmem>>, vector<16x256xf32>
    %1 = arith.truncf %0 : vector<16x256xf32> to vector<16x256xbf16>
    %c0_1 = arith.constant 0 : index
    %c0_2 = arith.constant 0 : index
    %2 = vector.load %arg2[%c0_1, %c0_2] : memref<256x256xbf16, #tpu.memory_space<vmem>>, vector<256x256xbf16>
    %cst = arith.constant dense<0.000000e+00> : vector<16x256xf32>
    %3 = tpu.matmul %1, %2, %cst {dimension_numbers = #tpu.dot_dimension_numbers<[1], [0], [0], [1], [0, 0, 1, 1], [], []>} : vector<16x256xbf16>, vector<256x256xbf16>, vector<16x256xf32> -> vector<16x256xf32>
    %c0_3 = arith.constant 0 : index
    %c0_4 = arith.constant 0 : index
    %4 = vector.load %arg3[%c0_3, %c0_4] : memref<1x256xf32, #tpu.memory_space<vmem>>, vector<1x256xf32>
    %5 = vector.broadcast %4 : vector<1x256xf32> to vector<16x256xf32>
    %6 = arith.addf %3, %5 : vector<16x256xf32>
    %cst_5 = arith.constant 0.000000e+00 : f32
    %7 = vector.broadcast %cst_5 : f32 to vector<16x256xf32>
    %8 = arith.maximumf %6, %7 : vector<16x256xf32>
    %9 = arith.truncf %8 : vector<16x256xf32> to vector<16x256xbf16>
    %c0_6 = arith.constant 0 : index
    %c0_7 = arith.constant 0 : index
    %10 = vector.load %arg4[%c0_6, %c0_7] : memref<256x512xbf16, #tpu.memory_space<vmem>>, vector<256x512xbf16>
    %cst_8 = arith.constant dense<0.000000e+00> : vector<16x512xf32>
    %11 = tpu.matmul %9, %10, %cst_8 {dimension_numbers = #tpu.dot_dimension_numbers<[1], [0], [0], [1], [0, 0, 1, 1], [], []>} : vector<16x256xbf16>, vector<256x512xbf16>, vector<16x512xf32> -> vector<16x512xf32>
    %c0_9 = arith.constant 0 : index
    %c0_10 = arith.constant 0 : index
    %12 = vector.load %arg5[%c0_9, %c0_10] : memref<1x512xf32, #tpu.memory_space<vmem>>, vector<1x512xf32>
    %13 = vector.broadcast %12 : vector<1x512xf32> to vector<16x512xf32>
    %14 = arith.addf %11, %13 : vector<16x512xf32>
    %c0_11 = arith.constant 0 : index
    %c0_12 = arith.constant 0 : index
    %15 = vector.load %arg6[%c0_11, %c0_12] : memref<16x512xf32, #tpu.memory_space<vmem>>, vector<16x512xf32>
    tpu.vector_store %arg6[%c0_11, %c0_12], %14 {strides = array<i32>} : memref<16x512xf32, #tpu.memory_space<vmem>>, vector<16x512xf32>,
    return
  }
  func.func @transform_0(%arg0: i32) -> (i32, i32) {
    %c0_i32 = arith.constant 0 : i32
    %c0_i32_0 = arith.constant 0 : i32
    return %arg0, %c0_i32 : i32, i32
  }
  func.func @transform_1(%arg0: i32) -> (i32, i32) {
    %c0_i32 = arith.constant 0 : i32
    %c0_i32_0 = arith.constant 0 : i32
    %c0_i32_1 = arith.constant 0 : i32
    return %c0_i32, %c0_i32_0 : i32, i32
  }
  func.func @transform_2(%arg0: i32) -> (i32, i32) {
    %c0_i32 = arith.constant 0 : i32
    %c0_i32_0 = arith.constant 0 : i32
    %c0_i32_1 = arith.constant 0 : i32
    return %c0_i32, %c0_i32_0 : i32, i32
  }
  func.func @transform_3(%arg0: i32) -> (i32, i32) {
    %c0_i32 = arith.constant 0 : i32
    %c0_i32_0 = arith.constant 0 : i32
    %c0_i32_1 = arith.constant 0 : i32
    return %c0_i32, %c0_i32_0 : i32, i32
  }
  func.func @transform_4(%arg0: i32) -> (i32, i32) {
    %c0_i32 = arith.constant 0 : i32
    %c0_i32_0 = arith.constant 0 : i32
    %c0_i32_1 = arith.constant 0 : i32
    return %c0_i32, %c0_i32_0 : i32, i32
  }
  func.func @transform_5(%arg0: i32) -> (i32, i32) {
    %c0_i32 = arith.constant 0 : i32
    %c0_i32_0 = arith.constant 0 : i32
    return %arg0, %c0_i32 : i32, i32
  }
}

</mosaic_0001>

<llo_original>
// kernel: tpu_custom_call.1
$region0: #{tpu_custom_call.1}
  #allocation0 [shape = 'u32[]', space=smem, size = 0x4, offset = 0x4, fixed_abs, tag = 'smem constant byte address 0x4 - core index']
  #allocation1 [shape = 'u32[144,128]{1,0:T(1,128)}', space=vmem, size = 0x12000, scoped, tag = 'internal scratch']
  %s0 = inlined_call_operand.hbm [shape: f32[16,256], index: 0, kind: input, shape index: {}]
  %s1 = inlined_call_operand.hbm [shape: bf16[256,256], index: 1, kind: input, shape index: {}]
  %s2 = inlined_call_operand.vmem [shape: f32[1,256], index: 2, kind: input, shape index: {}]
  %s3 = inlined_call_operand.hbm [shape: bf16[256,512], index: 3, kind: input, shape index: {}]
  %s4 = inlined_call_operand.vmem [shape: f32[1,512], index: 4, kind: input, shape index: {}]
  %s5 = inlined_call_operand.hbm [shape: f32[16,512], index: 5, kind: output, shape index: {}]
  %s6 = sld [smem:[#allocation0]]
  $region42: #{tpu_custom_call.1} parent=0
    _
  %s8 = ssub.s32 1, %s6
  %s9 = scalar_select 0, %s8, %s6
  $region1: #{tpu_custom_call.1} parent=0
    #allocation2 [shape = 'u8[16384]{0}', space=vmem, size = 0x4000, scoped, tag = 'input window, operand 0, single buffered']
    #allocation3 [shape = 's32[1]{0}', space=sflag, size = 0x4, scoped, tag = 'scoped memory for tpu_custom_call.1']
    #allocation4 [shape = 's32[1]{0}', space=sflag, size = 0x4, scoped, tag = 'scoped memory for tpu_custom_call.1']
    #allocation5 [shape = 'u8[131072]{0}', space=vmem, size = 0x20000, scoped, tag = 'input window, operand 1, single buffered']
    #allocation6 [shape = 's32[1]{0}', space=sflag, size = 0x4, scoped, tag = 'scoped memory for tpu_custom_call.1']
    #allocation7 [shape = 'u8[262144]{0}', space=vmem, size = 0x40000, scoped, tag = 'input window, operand 3, single buffered']
    #allocation8 [shape = 'u8[32768]{0}', space=vmem, size = 0x8000, scoped, tag = 'output window, operand 0, single buffered']
    %10 = vsyncpa [#allocation3], 0
    %11 = vsyncpa [#allocation6], 0
    %12 = vsyncpa [#allocation4], 0
    // Predicated region
    $region2: #{tpu_custom_call.1} parent=1 // pred_check
      _
    $region3: #{tpu_custom_call.1} parent=1 // pred_check_branch
      %14 = sbr.rel (0) target = $region5
    $region4: #{tpu_custom_call.1} parent=1 // pred_region
      %s16 = ssub.s32 512, 512
      %17 = vsyncadd [#allocation3], %s16
      %s18 = sshll.u32 [#allocation2], 4
      %s19 = int_to_ptr.vmem [resolvable:$true] %s18
      %24 = dma.hbm_to_vmem [thread:$0]  %s0, 512, %s19, [#allocation3], 256, 256, 16
    $region5: #{tpu_custom_call.1} parent=1 // pred_fallthru
      _
    // Predicated region
    $region6: #{tpu_custom_call.1} parent=1 // pred_check
      _
    $region7: #{tpu_custom_call.1} parent=1 // pred_check_branch
      %26 = sbr.rel (0) target = $region9
    $region8: #{tpu_custom_call.1} parent=1 // pred_region
      %s28 = ssub.s32 4096, 4096
      %29 = vsyncadd [#allocation6], %s28
      %s30 = sshll.u32 [#allocation5], 4
      %s31 = int_to_ptr.vmem [resolvable:$true] %s30
      %36 = dma.hbm_to_vmem [thread:$0]  %s1, 4096, %s31, [#allocation6], 128, 128, 8
    $region9: #{tpu_custom_call.1} parent=1 // pred_fallthru
      _
    // Predicated region
    $region10: #{tpu_custom_call.1} parent=1 // pred_check
      _
    $region11: #{tpu_custom_call.1} parent=1 // pred_check_branch
      %38 = sbr.rel (0) target = $region13
    $region12: #{tpu_custom_call.1} parent=1 // pred_region
      _
    $region13: #{tpu_custom_call.1} parent=1 // pred_fallthru
      _
    // Predicated region
    $region14: #{tpu_custom_call.1} parent=1 // pred_check
      _
    $region15: #{tpu_custom_call.1} parent=1 // pred_check_branch
      %40 = sbr.rel (0) target = $region17
    $region16: #{tpu_custom_call.1} parent=1 // pred_region
      %s42 = ssub.s32 8192, 8192
      %43 = vsyncadd [#allocation6], %s42
      %s44 = sshll.u32 [#allocation7], 4
      %s45 = int_to_ptr.vmem [resolvable:$true] %s44
      %50 = dma.hbm_to_vmem [thread:$0]  %s3, 8192, %s45, [#allocation6], 256, 256, 16
    $region17: #{tpu_custom_call.1} parent=1 // pred_fallthru
      _
    // Predicated region
    $region18: #{tpu_custom_call.1} parent=1 // pred_check
      _
    $region19: #{tpu_custom_call.1} parent=1 // pred_check_branch
      %52 = sbr.rel (0) target = $region21
    $region20: #{tpu_custom_call.1} parent=1 // pred_region
      _
    $region21: #{tpu_custom_call.1} parent=1 // pred_fallthru
      _
    // Predicated region
    $region22: #{tpu_custom_call.1} parent=1 // pred_check
      _
    $region23: #{tpu_custom_call.1} parent=1 // pred_check_branch
      %54 = sbr.rel (0) target = $region25
    $region24: #{tpu_custom_call.1} parent=1 // pred_region
      %55 = dma.done [#allocation3], 512
    $region25: #{tpu_custom_call.1} parent=1 // pred_fallthru
      _
    // Predicated region
    $region26: #{tpu_custom_call.1} parent=1 // pred_check
      _
    $region27: #{tpu_custom_call.1} parent=1 // pred_check_branch
      %57 = sbr.rel (0) target = $region29
    $region28: #{tpu_custom_call.1} parent=1 // pred_region
      %58 = dma.done [#allocation6], 4096
    $region29: #{tpu_custom_call.1} parent=1 // pred_fallthru
      _
    // Predicated region
    $region30: #{tpu_custom_call.1} parent=1 // pred_check
      _
    $region31: #{tpu_custom_call.1} parent=1 // pred_check_branch
      %60 = sbr.rel (0) target = $region33
    $region32: #{tpu_custom_call.1} parent=1 // pred_region
      %61 = dma.done [#allocation6], 8192
    $region33: #{tpu_custom_call.1} parent=1 // pred_fallthru
      _
    %v62 = vld [vmem:[#allocation2] sm:$0xff]
    %v63 = vld [vmem:[#allocation2 + $0x8] sm:$0xff]
    %v64 = vld [vmem:[#allocation2 + $0x10] sm:$0xff]
    %v65 = vld [vmem:[#allocation2 + $0x18] sm:$0xff]
    %v66 = vpack.c.bf16 %v64, %v62
    %v67 = vpack.c.bf16 %v65, %v63
    %v68 = vld [vmem:[#allocation5] sm:$0xff]
    %v69 = vld [vmem:[#allocation5 + $0x8] sm:$0xff]
    %v70 = vld [vmem:[#allocation5 + $0x10] sm:$0xff]
    %v71 = vld [vmem:[#allocation5 + $0x18] sm:$0xff]
    %v72 = vld [vmem:[#allocation5 + $0x20] sm:$0xff]
    %v73 = vld [vmem:[#allocation5 + $0x28] sm:$0xff]
    %v74 = vld [vmem:[#allocation5 + $0x30] sm:$0xff]
    %v75 = vld [vmem:[#allocation5 + $0x38] sm:$0xff]
    %v76 = vld [vmem:[#allocation5 + $0x40] sm:$0xff]
    %v77 = vld [vmem:[#allocation5 + $0x48] sm:$0xff]
    %v78 = vld [vmem:[#allocation5 + $0x50] sm:$0xff]
    %v79 = vld [vmem:[#allocation5 + $0x58] sm:$0xff]
    %v80 = vld [vmem:[#allocation5 + $0x60] sm:$0xff]
    %v81 = vld [vmem:[#allocation5 + $0x68] sm:$0xff]
    %v82 = vld [vmem:[#allocation5 + $0x70] sm:$0xff]
    %v83 = vld [vmem:[#allocation5 + $0x78] sm:$0xff]
    %v84 = vld [vmem:[#allocation5 + $0x80] sm:$0xff]
    %v85 = vld [vmem:[#allocation5 + $0x88] sm:$0xff]
    %v86 = vld [vmem:[#allocation5 + $0x90] sm:$0xff]
    %v87 = vld [vmem:[#allocation5 + $0x98] sm:$0xff]
    %v88 = vld [vmem:[#allocation5 + $0xa0] sm:$0xff]
    %v89 = vld [vmem:[#allocation5 + $0xa8] sm:$0xff]
    %v90 = vld [vmem:[#allocation5 + $0xb0] sm:$0xff]
    %v91 = vld [vmem:[#allocation5 + $0xb8] sm:$0xff]
    %v92 = vld [vmem:[#allocation5 + $0xc0] sm:$0xff]
    %v93 = vld [vmem:[#allocation5 + $0xc8] sm:$0xff]
    %v94 = vld [vmem:[#allocation5 + $0xd0] sm:$0xff]
    %v95 = vld [vmem:[#allocation5 + $0xd8] sm:$0xff]
    %v96 = vld [vmem:[#allocation5 + $0xe0] sm:$0xff]
    %v97 = vld [vmem:[#allocation5 + $0xe8] sm:$0xff]
    %v98 = vld [vmem:[#allocation5 + $0xf0] sm:$0xff]
    %v99 = vld [vmem:[#allocation5 + $0xf8] sm:$0xff]
    %v100 = vld [vmem:[%s2] sm:$0x3]
    %v102 = vlaneseq
    %v103 = vshrl.u32 %v102, 7
    %v104 = vsub.s32 0, %v103
    %v105 = vrot.slane %v100, %v104
    %v106 = vlaneseq
    %v107 = vshrl.u32 %v106, 7
    %v108 = vsub.s32 1, %v107
    %v109 = vrot.slane %v100, %v108
    %v144 = vunpack.c.l.b16 %v68
    %v145 = vunpack.c.h.b16 %v68
    %v146 = vunpack.c.l.b16 %v69
    %v147 = vunpack.c.h.b16 %v69
    %v148 = vunpack.c.l.b16 %v70
    %v149 = vunpack.c.h.b16 %v70
    %v150 = vunpack.c.l.b16 %v71
    %v151 = vunpack.c.h.b16 %v71
    %v152 = vunpack.c.l.b16 %v72
    %v153 = vunpack.c.h.b16 %v72
    %v154 = vunpack.c.l.b16 %v73
    %v155 = vunpack.c.h.b16 %v73
    %v156 = vunpack.c.l.b16 %v74
    %v157 = vunpack.c.h.b16 %v74
    %v158 = vunpack.c.l.b16 %v75
    %v159 = vunpack.c.h.b16 %v75
    %v160 = vunpack.c.l.b16 %v76
    %v161 = vunpack.c.h.b16 %v76
    %v162 = vunpack.c.l.b16 %v77
    %v163 = vunpack.c.h.b16 %v77
    %v164 = vunpack.c.l.b16 %v78
    %v165 = vunpack.c.h.b16 %v78
    %v166 = vunpack.c.l.b16 %v79
    %v167 = vunpack.c.h.b16 %v79
    %v168 = vunpack.c.l.b16 %v80
    %v169 = vunpack.c.h.b16 %v80
    %v170 = vunpack.c.l.b16 %v81
    %v171 = vunpack.c.h.b16 %v81
    %v172 = vunpack.c.l.b16 %v82
    %v173 = vunpack.c.h.b16 %v82
    %v174 = vunpack.c.l.b16 %v83
    %v175 = vunpack.c.h.b16 %v83
    %v176 = vunpack.c.l.b16 %v84
    %v177 = vunpack.c.h.b16 %v84
    %v178 = vunpack.c.l.b16 %v85
    %v179 = vunpack.c.h.b16 %v85
    %v180 = vunpack.c.l.b16 %v86
    %v181 = vunpack.c.h.b16 %v86
    %v182 = vunpack.c.l.b16 %v87
    %v183 = vunpack.c.h.b16 %v87
    %v184 = vunpack.c.l.b16 %v88
    %v185 = vunpack.c.h.b16 %v88
    %v186 = vunpack.c.l.b16 %v89
    %v187 = vunpack.c.h.b16 %v89
    %v188 = vunpack.c.l.b16 %v90
    %v189 = vunpack.c.h.b16 %v90
    %v190 = vunpack.c.l.b16 %v91
    %v191 = vunpack.c.h.b16 %v91
    %v192 = vunpack.c.l.b16 %v92
    %v193 = vunpack.c.h.b16 %v92
    %v194 = vunpack.c.l.b16 %v93
    %v195 = vunpack.c.h.b16 %v93
    %v196 = vunpack.c.l.b16 %v94
    %v197 = vunpack.c.h.b16 %v94
    %v198 = vunpack.c.l.b16 %v95
    %v199 = vunpack.c.h.b16 %v95
    %v200 = vunpack.c.l.b16 %v96
    %v201 = vunpack.c.h.b16 %v96
    %v202 = vunpack.c.l.b16 %v97
    %v203 = vunpack.c.h.b16 %v97
    %v204 = vunpack.c.l.b16 %v98
    %v205 = vunpack.c.h.b16 %v98
    %v206 = vunpack.c.l.b16 %v99
    %v207 = vunpack.c.h.b16 %v99
    %v208 = vpack.c.b16 %v146, %v144
    %v209 = vpack.c.b16 %v147, %v145
    %v210 = vpack.c.b16 %v150, %v148
    %v211 = vpack.c.b16 %v151, %v149
    %v212 = vpack.c.b16 %v154, %v152
    %v213 = vpack.c.b16 %v155, %v153
    %v214 = vpack.c.b16 %v158, %v156
    %v215 = vpack.c.b16 %v159, %v157
    %v216 = vpack.c.b16 %v162, %v160
    %v217 = vpack.c.b16 %v163, %v161
    %v218 = vpack.c.b16 %v166, %v164
    %v219 = vpack.c.b16 %v167, %v165
    %v220 = vpack.c.b16 %v170, %v168
    %v221 = vpack.c.b16 %v171, %v169
    %v222 = vpack.c.b16 %v174, %v172
    %v223 = vpack.c.b16 %v175, %v173
    %v224 = vpack.c.b16 %v178, %v176
    %v225 = vpack.c.b16 %v179, %v177
    %v226 = vpack.c.b16 %v182, %v180
    %v227 = vpack.c.b16 %v183, %v181
    %v228 = vpack.c.b16 %v186, %v184
    %v229 = vpack.c.b16 %v187, %v185
    %v230 = vpack.c.b16 %v190, %v188
    %v231 = vpack.c.b16 %v191, %v189
    %v232 = vpack.c.b16 %v194, %v192
    %v233 = vpack.c.b16 %v195, %v193
    %v234 = vpack.c.b16 %v198, %v196
    %v235 = vpack.c.b16 %v199, %v197
    %v236 = vpack.c.b16 %v202, %v200
    %v237 = vpack.c.b16 %v203, %v201
    %v238 = vpack.c.b16 %v206, %v204
    %v239 = vpack.c.b16 %v207, %v205
    %272 = vmatprep.subr.bf16.mxu0 %v209
    %273 = vmatpush1.bf16.msra.mxu0 %v208
    %274 = vmatprep.subr.bf16.mxu0 %v211
    %275 = vmatpush1.bf16.msra.mxu0 %v210
    %276 = vmatprep.subr.bf16.mxu0 %v213
    %277 = vmatpush1.bf16.msra.mxu0 %v212
    %278 = vmatprep.subr.bf16.mxu0 %v215
    %279 = vmatpush1.bf16.msra.mxu0 %v214
    %280 = vmatprep.subr.bf16.mxu0 %v217
    %281 = vmatpush1.bf16.msra.mxu0 %v216
    %282 = vmatprep.subr.bf16.mxu0 %v219
    %283 = vmatpush1.bf16.msra.mxu0 %v218
    %284 = vmatprep.subr.bf16.mxu0 %v221
    %285 = vmatpush1.bf16.msra.mxu0 %v220
    %286 = vmatprep.subr.bf16.mxu0 %v223
    %287 = vmatpush1.bf16.msra.mxu0 %v222
    %288 = vmatprep.subr.bf16.mxu0 %v225
    %289 = vmatpush1.bf16.msra.mxu0 %v224
    %290 = vmatprep.subr.bf16.mxu0 %v227
    %291 = vmatpush1.bf16.msra.mxu0 %v226
    %292 = vmatprep.subr.bf16.mxu0 %v229
    %293 = vmatpush1.bf16.msra.mxu0 %v228
    %294 = vmatprep.subr.bf16.mxu0 %v231
    %295 = vmatpush1.bf16.msra.mxu0 %v230
    %296 = vmatprep.subr.bf16.mxu0 %v233
    %297 = vmatpush1.bf16.msra.mxu0 %v232
    %298 = vmatprep.subr.bf16.mxu0 %v235
    %299 = vmatpush1.bf16.msra.mxu0 %v234
    %300 = vmatprep.subr.bf16.mxu0 %v237
    %301 = vmatpush1.bf16.msra.mxu0 %v236
    %302 = vmatprep.subr.bf16.mxu0 %v239
    %303 = vmatpush1.bf16.msra.mxu0 %v238
    %304 = vmatprep.mubr.bf16.mxu0 %v67
    %305 = vmatmul.mubr.bf16.gmra.mrb[0].mxu0 %v66
    %v306 = vpop.f32.mrb[0].mxu0
    %v307 = vadd.f32 %v105, %v306
    %v308 = vpop.f32.mrb[0].mxu0
    %v309 = vadd.f32 %v109, %v308
    %v310 = vpop.f32.mrb[0].mxu0
    %v311 = vadd.f32 %v105, %v310
    %v312 = vpop.f32.mrb[0].mxu0
    %v313 = vadd.f32 %v109, %v312
    %314 = vdwg.mxu0
    %v315 = vmax.f32 %v307, 0.0
    %v316 = vmax.f32 %v309, 0.0
    %v317 = vmax.f32 %v311, 0.0
    %v318 = vmax.f32 %v313, 0.0
    %v319 = vpack.c.bf16 %v317, %v315
    %v320 = vpack.c.bf16 %v318, %v316
    %v321 = vld [vmem:[#allocation7] sm:$0xff]
    %v322 = vld [vmem:[#allocation7 + $0x8] sm:$0xff]
    %v323 = vld [vmem:[#allocation7 + $0x10] sm:$0xff]
    %v324 = vld [vmem:[#allocation7 + $0x18] sm:$0xff]
    %v325 = vld [vmem:[#allocation7 + $0x20] sm:$0xff]
    %v326 = vld [vmem:[#allocation7 + $0x28] sm:$0xff]
    %v327 = vld [vmem:[#allocation7 + $0x30] sm:$0xff]
    %v328 = vld [vmem:[#allocation7 + $0x38] sm:$0xff]
    %v329 = vld [vmem:[#allocation7 + $0x40] sm:$0xff]
    %v330 = vld [vmem:[#allocation7 + $0x48] sm:$0xff]
    %v331 = vld [vmem:[#allocation7 + $0x50] sm:$0xff]
    %v332 = vld [vmem:[#allocation7 + $0x58] sm:$0xff]
    %v333 = vld [vmem:[#allocation7 + $0x60] sm:$0xff]
    %v334 = vld [vmem:[#allocation7 + $0x68] sm:$0xff]
    %v335 = vld [vmem:[#allocation7 + $0x70] sm:$0xff]
    %v336 = vld [vmem:[#allocation7 + $0x78] sm:$0xff]
    %v337 = vld [vmem:[#allocation7 + $0x80] sm:$0xff]
    %v338 = vld [vmem:[#allocation7 + $0x88] sm:$0xff]
    %v339 = vld [vmem:[#allocation7 + $0x90] sm:$0xff]
    %v340 = vld [vmem:[#allocation7 + $0x98] sm:$0xff]
    %v341 = vld [vmem:[#allocation7 + $0xa0] sm:$0xff]
    %v342 = vld [vmem:[#allocation7 + $0xa8] sm:$0xff]
    %v343 = vld [vmem:[#allocation7 + $0xb0] sm:$0xff]
    %v344 = vld [vmem:[#allocation7 + $0xb8] sm:$0xff]
    %v345 = vld [vmem:[#allocation7 + $0xc0] sm:$0xff]
    %v346 = vld [vmem:[#allocation7 + $0xc8] sm:$0xff]
    %v347 = vld [vmem:[#allocation7 + $0xd0] sm:$0xff]
    %v348 = vld [vmem:[#allocation7 + $0xd8] sm:$0xff]
    %v349 = vld [vmem:[#allocation7 + $0xe0] sm:$0xff]
    %v350 = vld [vmem:[#allocation7 + $0xe8] sm:$0xff]
    %v351 = vld [vmem:[#allocation7 + $0xf0] sm:$0xff]
    %v352 = vld [vmem:[#allocation7 + $0xf8] sm:$0xff]
    %v353 = vld [vmem:[#allocation7 + $0x100] sm:$0xff]
    %v354 = vld [vmem:[#allocation7 + $0x108] sm:$0xff]
    %v355 = vld [vmem:[#allocation7 + $0x110] sm:$0xff]
    %v356 = vld [vmem:[#allocation7 + $0x118] sm:$0xff]
    %v357 = vld [vmem:[#allocation7 + $0x120] sm:$0xff]
    %v358 = vld [vmem:[#allocation7 + $0x128] sm:$0xff]
    %v359 = vld [vmem:[#allocation7 + $0x130] sm:$0xff]
    %v360 = vld [vmem:[#allocation7 + $0x138] sm:$0xff]
    %v361 = vld [vmem:[#allocation7 + $0x140] sm:$0xff]
    %v362 = vld [vmem:[#allocation7 + $0x148] sm:$0xff]
    %v363 = vld [vmem:[#allocation7 + $0x150] sm:$0xff]
    %v364 = vld [vmem:[#allocation7 + $0x158] sm:$0xff]
    %v365 = vld [vmem:[#allocation7 + $0x160] sm:$0xff]
    %v366 = vld [vmem:[#allocation7 + $0x168] sm:$0xff]
    %v367 = vld [vmem:[#allocation7 + $0x170] sm:$0xff]
    %v368 = vld [vmem:[#allocation7 + $0x178] sm:$0xff]
    %v369 = vld [vmem:[#allocation7 + $0x180] sm:$0xff]
    %v370 = vld [vmem:[#allocation7 + $0x188] sm:$0xff]
    %v371 = vld [vmem:[#allocation7 + $0x190] sm:$0xff]
    %v372 = vld [vmem:[#allocation7 + $0x198] sm:$0xff]
    %v373 = vld [vmem:[#allocation7 + $0x1a0] sm:$0xff]
    %v374 = vld [vmem:[#allocation7 + $0x1a8] sm:$0xff]
    %v375 = vld [vmem:[#allocation7 + $0x1b0] sm:$0xff]
    %v376 = vld [vmem:[#allocation7 + $0x1b8] sm:$0xff]
    %v377 = vld [vmem:[#allocation7 + $0x1c0] sm:$0xff]
    %v378 = vld [vmem:[#allocation7 + $0x1c8] sm:$0xff]
    %v379 = vld [vmem:[#allocation7 + $0x1d0] sm:$0xff]
    %v380 = vld [vmem:[#allocation7 + $0x1d8] sm:$0xff]
    %v381 = vld [vmem:[#allocation7 + $0x1e0] sm:$0xff]
    %v382 = vld [vmem:[#allocation7 + $0x1e8] sm:$0xff]
    %v383 = vld [vmem:[#allocation7 + $0x1f0] sm:$0xff]
    %v384 = vld [vmem:[#allocation7 + $0x1f8] sm:$0xff]
    %v385 = vld [vmem:[%s4] sm:$0xf]
    %v387 = vlaneseq
    %v388 = vshrl.u32 %v387, 7
    %v389 = vsub.s32 0, %v388
    %v390 = vrot.slane %v385, %v389
    %v391 = vlaneseq
    %v392 = vshrl.u32 %v391, 7
    %v393 = vsub.s32 1, %v392
    %v394 = vrot.slane %v385, %v393
    %v395 = vlaneseq
    %v396 = vshrl.u32 %v395, 7
    %v397 = vsub.s32 2, %v396
    %v398 = vrot.slane %v385, %v397
    %v399 = vlaneseq
    %v400 = vshrl.u32 %v399, 7
    %v401 = vsub.s32 3, %v400
    %v402 = vrot.slane %v385, %v401
    %v471 = vunpack.c.l.b16 %v321
    %v472 = vunpack.c.h.b16 %v321
    %v473 = vunpack.c.l.b16 %v322
    %v474 = vunpack.c.h.b16 %v322
    %v475 = vunpack.c.l.b16 %v323
    %v476 = vunpack.c.h.b16 %v323
    %v477 = vunpack.c.l.b16 %v324
    %v478 = vunpack.c.h.b16 %v324
    %v479 = vunpack.c.l.b16 %v325
    %v480 = vunpack.c.h.b16 %v325
    %v481 = vunpack.c.l.b16 %v326
    %v482 = vunpack.c.h.b16 %v326
    %v483 = vunpack.c.l.b16 %v327
    %v484 = vunpack.c.h.b16 %v327
    %v485 = vunpack.c.l.b16 %v328
    %v486 = vunpack.c.h.b16 %v328
    %v487 = vunpack.c.l.b16 %v329
    %v488 = vunpack.c.h.b16 %v329
    %v489 = vunpack.c.l.b16 %v330
    %v490 = vunpack.c.h.b16 %v330
    %v491 = vunpack.c.l.b16 %v331
    %v492 = vunpack.c.h.b16 %v331
    %v493 = vunpack.c.l.b16 %v332
    %v494 = vunpack.c.h.b16 %v332
    %v495 = vunpack.c.l.b16 %v333
    %v496 = vunpack.c.h.b16 %v333
    %v497 = vunpack.c.l.b16 %v334
    %v498 = vunpack.c.h.b16 %v334
    %v499 = vunpack.c.l.b16 %v335
    %v500 = vunpack.c.h.b16 %v335
    %v501 = vunpack.c.l.b16 %v336
    %v502 = vunpack.c.h.b16 %v336
    %v503 = vunpack.c.l.b16 %v337
    %v504 = vunpack.c.h.b16 %v337
    %v505 = vunpack.c.l.b16 %v338
    %v506 = vunpack.c.h.b16 %v338
    %v507 = vunpack.c.l.b16 %v339
    %v508 = vunpack.c.h.b16 %v339
    %v509 = vunpack.c.l.b16 %v340
    %v510 = vunpack.c.h.b16 %v340
    %v511 = vunpack.c.l.b16 %v341
    %v512 = vunpack.c.h.b16 %v341
    %v513 = vunpack.c.l.b16 %v342
    %v514 = vunpack.c.h.b16 %v342
    %v515 = vunpack.c.l.b16 %v343
    %v516 = vunpack.c.h.b16 %v343
    %v517 = vunpack.c.l.b16 %v344
    %v518 = vunpack.c.h.b16 %v344
    %v519 = vunpack.c.l.b16 %v345
    %v520 = vunpack.c.h.b16 %v345
    %v521 = vunpack.c.l.b16 %v346
    %v522 = vunpack.c.h.b16 %v346
    %v523 = vunpack.c.l.b16 %v347
    %v524 = vunpack.c.h.b16 %v347
    %v525 = vunpack.c.l.b16 %v348
    %v526 = vunpack.c.h.b16 %v348
    %v527 = vunpack.c.l.b16 %v349
    %v528 = vunpack.c.h.b16 %v349
    %v529 = vunpack.c.l.b16 %v350
    %v530 = vunpack.c.h.b16 %v350
    %v531 = vunpack.c.l.b16 %v351
    %v532 = vunpack.c.h.b16 %v351
    %v533 = vunpack.c.l.b16 %v352
    %v534 = vunpack.c.h.b16 %v352
    %v535 = vunpack.c.l.b16 %v353
    %v536 = vunpack.c.h.b16 %v353
    %v537 = vunpack.c.l.b16 %v354
    %v538 = vunpack.c.h.b16 %v354
    %v539 = vunpack.c.l.b16 %v355
    %v540 = vunpack.c.h.b16 %v355
    %v541 = vunpack.c.l.b16 %v356
    %v542 = vunpack.c.h.b16 %v356
    %v543 = vunpack.c.l.b16 %v357
    %v544 = vunpack.c.h.b16 %v357
    %v545 = vunpack.c.l.b16 %v358
    %v546 = vunpack.c.h.b16 %v358
    %v547 = vunpack.c.l.b16 %v359
    %v548 = vunpack.c.h.b16 %v359
    %v549 = vunpack.c.l.b16 %v360
    %v550 = vunpack.c.h.b16 %v360
    %v551 = vunpack.c.l.b16 %v361
    %v552 = vunpack.c.h.b16 %v361
    %v553 = vunpack.c.l.b16 %v362
    %v554 = vunpack.c.h.b16 %v362
    %v555 = vunpack.c.l.b16 %v363
    %v556 = vunpack.c.h.b16 %v363
    %v557 = vunpack.c.l.b16 %v364
    %v558 = vunpack.c.h.b16 %v364
    %v559 = vunpack.c.l.b16 %v365
    %v560 = vunpack.c.h.b16 %v365
    %v561 = vunpack.c.l.b16 %v366
    %v562 = vunpack.c.h.b16 %v366
    %v563 = vunpack.c.l.b16 %v367
    %v564 = vunpack.c.h.b16 %v367
    %v565 = vunpack.c.l.b16 %v368
    %v566 = vunpack.c.h.b16 %v368
    %v567 = vunpack.c.l.b16 %v369
    %v568 = vunpack.c.h.b16 %v369
    %v569 = vunpack.c.l.b16 %v370
    %v570 = vunpack.c.h.b16 %v370
    %v571 = vunpack.c.l.b16 %v371
    %v572 = vunpack.c.h.b16 %v371
    %v573 = vunpack.c.l.b16 %v372
    %v574 = vunpack.c.h.b16 %v372
    %v575 = vunpack.c.l.b16 %v373
    %v576 = vunpack.c.h.b16 %v373
    %v577 = vunpack.c.l.b16 %v374
    %v578 = vunpack.c.h.b16 %v374
    %v579 = vunpack.c.l.b16 %v375
    %v580 = vunpack.c.h.b16 %v375
    %v581 = vunpack.c.l.b16 %v376
    %v582 = vunpack.c.h.b16 %v376
    %v583 = vunpack.c.l.b16 %v377
    %v584 = vunpack.c.h.b16 %v377
    %v585 = vunpack.c.l.b16 %v378
    %v586 = vunpack.c.h.b16 %v378
    %v587 = vunpack.c.l.b16 %v379
    %v588 = vunpack.c.h.b16 %v379
    %v589 = vunpack.c.l.b16 %v380
    %v590 = vunpack.c.h.b16 %v380
    %v591 = vunpack.c.l.b16 %v381
    %v592 = vunpack.c.h.b16 %v381
    %v593 = vunpack.c.l.b16 %v382
    %v594 = vunpack.c.h.b16 %v382
    %v595 = vunpack.c.l.b16 %v383
    %v596 = vunpack.c.h.b16 %v383
    %v597 = vunpack.c.l.b16 %v384
    %v598 = vunpack.c.h.b16 %v384
    %v599 = vpack.c.b16 %v475, %v471
    %v600 = vpack.c.b16 %v476, %v472
    %v601 = vpack.c.b16 %v477, %v473
    %v602 = vpack.c.b16 %v478, %v474
    %v603 = vpack.c.b16 %v483, %v479
    %v604 = vpack.c.b16 %v484, %v480
    %v605 = vpack.c.b16 %v485, %v481
    %v606 = vpack.c.b16 %v486, %v482
    %v607 = vpack.c.b16 %v491, %v487
    %v608 = vpack.c.b16 %v492, %v488
    %v609 = vpack.c.b16 %v493, %v489
    %v610 = vpack.c.b16 %v494, %v490
    %v611 = vpack.c.b16 %v499, %v495
    %v612 = vpack.c.b16 %v500, %v496
    %v613 = vpack.c.b16 %v501, %v497
    %v614 = vpack.c.b16 %v502, %v498
    %v615 = vpack.c.b16 %v507, %v503
    %v616 = vpack.c.b16 %v508, %v504
    %v617 = vpack.c.b16 %v509, %v505
    %v618 = vpack.c.b16 %v510, %v506
    %v619 = vpack.c.b16 %v515, %v511
    %v620 = vpack.c.b16 %v516, %v512
    %v621 = vpack.c.b16 %v517, %v513
    %v622 = vpack.c.b16 %v518, %v514
    %v623 = vpack.c.b16 %v523, %v519
    %v624 = vpack.c.b16 %v524, %v520
    %v625 = vpack.c.b16 %v525, %v521
    %v626 = vpack.c.b16 %v526, %v522
    %v627 = vpack.c.b16 %v531, %v527
    %v628 = vpack.c.b16 %v532, %v528
    %v629 = vpack.c.b16 %v533, %v529
    %v630 = vpack.c.b16 %v534, %v530
    %v631 = vpack.c.b16 %v539, %v535
    %v632 = vpack.c.b16 %v540, %v536
    %v633 = vpack.c.b16 %v541, %v537
    %v634 = vpack.c.b16 %v542, %v538
    %v635 = vpack.c.b16 %v547, %v543
    %v636 = vpack.c.b16 %v548, %v544
    %v637 = vpack.c.b16 %v549, %v545
    %v638 = vpack.c.b16 %v550, %v546
    %v639 = vpack.c.b16 %v555, %v551
    %v640 = vpack.c.b16 %v556, %v552
    %v641 = vpack.c.b16 %v557, %v553
    %v642 = vpack.c.b16 %v558, %v554
    %v643 = vpack.c.b16 %v563, %v559
    %v644 = vpack.c.b16 %v564, %v560
    %v645 = vpack.c.b16 %v565, %v561
    %v646 = vpack.c.b16 %v566, %v562
    %v647 = vpack.c.b16 %v571, %v567
    %v648 = vpack.c.b16 %v572, %v568
    %v649 = vpack.c.b16 %v573, %v569
    %v650 = vpack.c.b16 %v574, %v570
    %v651 = vpack.c.b16 %v579, %v575
    %v652 = vpack.c.b16 %v580, %v576
    %v653 = vpack.c.b16 %v581, %v577
    %v654 = vpack.c.b16 %v582, %v578
    %v655 = vpack.c.b16 %v587, %v583
    %v656 = vpack.c.b16 %v588, %v584
    %v657 = vpack.c.b16 %v589, %v585
    %v658 = vpack.c.b16 %v590, %v586
    %v659 = vpack.c.b16 %v595, %v591
    %v660 = vpack.c.b16 %v596, %v592
    %v661 = vpack.c.b16 %v597, %v593
    %v662 = vpack.c.b16 %v598, %v594
    %727 = vmatprep.subr.bf16.mxu0 %v600
    %728 = vmatpush1.bf16.msra.mxu0 %v599
    %729 = vmatprep.subr.bf16.mxu0 %v604
    %730 = vmatpush1.bf16.msra.mxu0 %v603
    %731 = vmatprep.subr.bf16.mxu0 %v608
    %732 = vmatpush1.bf16.msra.mxu0 %v607
    %733 = vmatprep.subr.bf16.mxu0 %v612
    %734 = vmatpush1.bf16.msra.mxu0 %v611
    %735 = vmatprep.subr.bf16.mxu0 %v616
    %736 = vmatpush1.bf16.msra.mxu0 %v615
    %737 = vmatprep.subr.bf16.mxu0 %v620
    %738 = vmatpush1.bf16.msra.mxu0 %v619
    %739 = vmatprep.subr.bf16.mxu0 %v624
    %740 = vmatpush1.bf16.msra.mxu0 %v623
    %741 = vmatprep.subr.bf16.mxu0 %v628
    %742 = vmatpush1.bf16.msra.mxu0 %v627
    %743 = vmatprep.subr.bf16.mxu0 %v632
    %744 = vmatpush1.bf16.msra.mxu0 %v631
    %745 = vmatprep.subr.bf16.mxu0 %v636
    %746 = vmatpush1.bf16.msra.mxu0 %v635
    %747 = vmatprep.subr.bf16.mxu0 %v640
    %748 = vmatpush1.bf16.msra.mxu0 %v639
    %749 = vmatprep.subr.bf16.mxu0 %v644
    %750 = vmatpush1.bf16.msra.mxu0 %v643
    %751 = vmatprep.subr.bf16.mxu0 %v648
    %752 = vmatpush1.bf16.msra.mxu0 %v647
    %753 = vmatprep.subr.bf16.mxu0 %v652
    %754 = vmatpush1.bf16.msra.mxu0 %v651
    %755 = vmatprep.subr.bf16.mxu0 %v656
    %756 = vmatpush1.bf16.msra.mxu0 %v655
    %757 = vmatprep.subr.bf16.mxu0 %v660
    %758 = vmatpush1.bf16.msra.mxu0 %v659
    %759 = vmatprep.mubr.bf16.mxu0 %v320
    %760 = vmatmul.mubr.bf16.gmra.mrb[0].mxu0 %v319
    %v761 = vpop.f32.mrb[0].mxu0
    %v762 = vadd.f32 %v390, %v761
    %v763 = vpop.f32.mrb[0].mxu0
    %v764 = vadd.f32 %v394, %v763
    %v765 = vpop.f32.mrb[0].mxu0
    %v766 = vadd.f32 %v390, %v765
    %v767 = vpop.f32.mrb[0].mxu0
    %v768 = vadd.f32 %v394, %v767
    %769 = vdwg.mxu0
    %770 = vmatprep.subr.bf16.mxu0 %v602
    %771 = vmatpush1.bf16.msra.mxu0 %v601
    %772 = vmatprep.subr.bf16.mxu0 %v606
    %773 = vmatpush1.bf16.msra.mxu0 %v605
    %774 = vmatprep.subr.bf16.mxu0 %v610
    %775 = vmatpush1.bf16.msra.mxu0 %v609
    %776 = vmatprep.subr.bf16.mxu0 %v614
    %777 = vmatpush1.bf16.msra.mxu0 %v613
    %778 = vmatprep.subr.bf16.mxu0 %v618
    %779 = vmatpush1.bf16.msra.mxu0 %v617
    %780 = vmatprep.subr.bf16.mxu0 %v622
    %781 = vmatpush1.bf16.msra.mxu0 %v621
    %782 = vmatprep.subr.bf16.mxu0 %v626
    %783 = vmatpush1.bf16.msra.mxu0 %v625
    %784 = vmatprep.subr.bf16.mxu0 %v630
    %785 = vmatpush1.bf16.msra.mxu0 %v629
    %786 = vmatprep.subr.bf16.mxu0 %v634
    %787 = vmatpush1.bf16.msra.mxu0 %v633
    %788 = vmatprep.subr.bf16.mxu0 %v638
    %789 = vmatpush1.bf16.msra.mxu0 %v637
    %790 = vmatprep.subr.bf16.mxu0 %v642
    %791 = vmatpush1.bf16.msra.mxu0 %v641
    %792 = vmatprep.subr.bf16.mxu0 %v646
    %793 = vmatpush1.bf16.msra.mxu0 %v645
    %794 = vmatprep.subr.bf16.mxu0 %v650
    %795 = vmatpush1.bf16.msra.mxu0 %v649
    %796 = vmatprep.subr.bf16.mxu0 %v654
    %797 = vmatpush1.bf16.msra.mxu0 %v653
    %798 = vmatprep.subr.bf16.mxu0 %v658
    %799 = vmatpush1.bf16.msra.mxu0 %v657
    %800 = vmatprep.subr.bf16.mxu0 %v662
    %801 = vmatpush1.bf16.msra.mxu0 %v661
    %802 = vmatprep.mubr.bf16.mxu0 %v320
    %803 = vmatmul.mubr.bf16.gmra.mrb[0].mxu0 %v319
    %v804 = vpop.f32.mrb[0].mxu0
    %v805 = vadd.f32 %v398, %v804
    %v806 = vpop.f32.mrb[0].mxu0
    %v807 = vadd.f32 %v402, %v806
    %v808 = vpop.f32.mrb[0].mxu0
    %v809 = vadd.f32 %v398, %v808
    %v810 = vpop.f32.mrb[0].mxu0
    %v811 = vadd.f32 %v402, %v810
    %812 = vdwg.mxu0
    %813 = vst [vmem:[#allocation8] sm:$0xff] %v762
    %814 = vst [vmem:[#allocation8 + $0x8] sm:$0xff] %v764
    %815 = vst [vmem:[#allocation8 + $0x10] sm:$0xff] %v805
    %816 = vst [vmem:[#allocation8 + $0x18] sm:$0xff] %v807
    %817 = vst [vmem:[#allocation8 + $0x20] sm:$0xff] %v766
    %818 = vst [vmem:[#allocation8 + $0x28] sm:$0xff] %v768
    %819 = vst [vmem:[#allocation8 + $0x30] sm:$0xff] %v809
    %820 = vst [vmem:[#allocation8 + $0x38] sm:$0xff] %v811
    // Predicated region
    $region34: #{tpu_custom_call.1} parent=1 // pred_check
      _
    $region35: #{tpu_custom_call.1} parent=1 // pred_check_branch
      %822 = sbr.rel (0) target = $region37
    $region36: #{tpu_custom_call.1} parent=1 // pred_region
      %s824 = ssub.s32 1024, 1024
      %825 = vsyncadd [#allocation4], %s824
      %s826 = sshll.u32 [#allocation8], 4
      %s827 = int_to_ptr.vmem [resolvable:$true] %s826
      %832 = dma.vmem_to_hbm [thread:$0]  %s827, 1024, %s5, [#allocation4], 512, 512, 32
    $region37: #{tpu_custom_call.1} parent=1 // pred_fallthru
      _
    // Predicated region
    $region38: #{tpu_custom_call.1} parent=1 // pred_check
      _
    $region39: #{tpu_custom_call.1} parent=1 // pred_check_branch
      %834 = sbr.rel (0) target = $region41
    $region40: #{tpu_custom_call.1} parent=1 // pred_region
      %835 = dma.done [#allocation4], 1024
    $region41: #{tpu_custom_call.1} parent=1 // pred_fallthru
      _
    %836 = vsyncpa [#allocation3], 1
    %837 = vsyncpa [#allocation6], 1
    %838 = vsyncpa [#allocation4], 1

</llo_original>
